<compile_context>
chip_gen: v6e
topology: v6e:2x2x1
jax: 0.10.0
libtpu: 0.0.40
codegen_flags: <defaults>
</compile_context>

<pallas_src>
import functools

import jax
import jax.numpy as jnp
from jax.experimental import pallas as pl
from jax.experimental.pallas import tpu as pltpu


# ----------------------------- Pallas kernel -------------------------------

def _fused_deepset_kernel(patch_ref, bias_ref, wc_ref, bc_ref,
                          w1_ref, b1_ref, w2_ref, b2_ref, w3_ref, b3_ref,
                          out_ref, *, n_cout, n_k):
    """One batch tile per grid step: conv -> tanh -> fused embedding matmul ->
    segmented masked max -> post_ff MLP, all resident in VMEM/vregs.

    patch_ref: (1, K, M, HW)   im2col taps, M = B_TILE * set rows
    bias_ref : (1, B_TILE, M)  additive pooling bias (0 / -1e10 / -2e10)
    wc_ref   : (C*K,) SMEM     flat conv weights
    bc_ref   : (C,)   SMEM     conv bias
    w1_ref   : (C*HW, E)  b1_ref: (1, E)
    w2_ref   : (E, H2)    b2_ref: (1, H2)
    w3_ref   : (H2, O)    b3_ref: (1, O)
    out_ref  : (1, B_TILE, O)
    """
    mm_dtype = w1_ref.dtype

    # 3x3 conv as n_k scalar-weighted VPU fmas per output channel (K = Cin*9 is
    # tiny here; switch to an MXU formulation only if Cin grows).
    slabs = [patch_ref[0, k] for k in range(n_k)]            # n_k x (M, HW) f32
    conv_chans = []
    for c in range(n_cout):
        acc = slabs[0] * wc_ref[c * n_k]
        for k in range(1, n_k):
            acc = acc + slabs[k] * wc_ref[c * n_k + k]
        conv_chans.append(jnp.tanh(acc + bc_ref[c]))         # (M, HW)

    # Channel-major concat == PyTorch flatten order -> ONE MXU matmul.
    conv_all = jnp.concatenate(conv_chans, axis=-1)          # (M, C*HW)
    emb = jnp.dot(conv_all.astype(mm_dtype), w1_ref[...],
                  preferred_element_type=jnp.float32) + b1_ref[...]   # (M, E) f32

    # Segmented masked max over the set (kept in f32; bias precomputed so rows
    # of other batch elements in the tile can never win the max).
    pooled = jnp.max(emb[None, :, :] + bias_ref[0][:, :, None], axis=1)  # (B_TILE, E)

    # post_ff: Linear -> tanh -> Linear, batched over the B_TILE rows.
    h = jnp.tanh(jnp.dot(pooled.astype(mm_dtype), w2_ref[...],
                         preferred_element_type=jnp.float32) + b2_ref[...])
    out_ref[0] = (jnp.dot(h.astype(mm_dtype), w3_ref[...],
                          preferred_element_type=jnp.float32) + b3_ref[...])


# ----------------------------- wrapper --------------------------------------

def _make_patches(x, b_tile):
    """x: (bs, set, Cin, H, W) -> (bs//b_tile, Cin*9, b_tile*set, H*W); k=3,s=1,p=1.

    Built directly in the kernel's (tile, K, rows, HW) layout (no transpose pass).
    Tap index k = cin*9 + ky*3 + kx matches wc.reshape(-1) ordering."""
    bs, S, Cin, H, W = x.shape
    n_tiles = bs // b_tile
    xp = jnp.pad(x, ((0, 0), (0, 0), (0, 0), (1, 1), (1, 1)))
    xp = xp.reshape(n_tiles, b_tile * S, Cin, H + 2, W + 2)
    cols = []
    for cin in range(Cin):
        for ky in range(3):
            for kx in range(3):
                cols.append(xp[:, :, cin, ky:ky + H, kx:kx + W]
                            .reshape(n_tiles, b_tile * S, H * W))
    return jnp.stack(cols, axis=1)                           # (n_tiles, K, M, HW)


def image_deepset_forward(x, mask, params, *, b_tile=2, matmul_dtype=jnp.float32):
    """x: (bs, set, d, h, w) float32; mask: (bs, set) float32 in {0,1}."""
    bs, S, d, h, w = x.shape
    HW = h * w
    C, Cin = params['wc'].shape[:2]
    K = Cin * 9
    F, E = params['w1'].shape
    H2 = params['w2'].shape[1]
    O = params['w3'].shape[1]
    assert F == C * HW

    # Pad the batch to a multiple of the tile (padded rows are fully masked and
    # sliced away at the end).
    bs_pad = -(-bs // b_tile) * b_tile
    if bs_pad != bs:
        x = jnp.pad(x, ((0, bs_pad - bs), (0, 0), (0, 0), (0, 0), (0, 0)))
        mask = jnp.pad(mask, ((0, bs_pad - bs), (0, 0)))
    n_tiles = bs_pad // b_tile
    M = b_tile * S

    patches = _make_patches(x, b_tile)                       # (n_tiles, K, M, HW)

    # Additive pooling bias per tile row: 0 = keep, -1e10 = masked (the module's
    # sentinel), -2e10 = row belongs to another batch element in the tile
    # (strictly below any own-row value, so the segmented max matches the
    # reference exactly, even for fully-masked rows).
    mk = mask.astype(jnp.float32).reshape(n_tiles, 1, M)
    row_owner = (jnp.arange(M) // S)[None, None, :]
    own = row_owner == jnp.arange(b_tile)[None, :, None]
    pool_bias = jnp.where(own, (1.0 - mk) * -1e10, -2e10).astype(jnp.float32)

    wc_flat = params['wc'].reshape(-1).astype(jnp.float32)   # (C*K,)  -> SMEM
    bc = params['bc'].astype(jnp.float32)                    # (C,)    -> SMEM

    kernel = functools.partial(_fused_deepset_kernel, n_cout=C, n_k=K)

    out = pl.pallas_call(
        kernel,
        out_shape=jax.ShapeDtypeStruct((n_tiles, b_tile, O), jnp.float32),
        grid=(n_tiles,),
        in_specs=[
            pl.BlockSpec((1, K, M, HW), lambda b: (b, 0, 0, 0)),
            pl.BlockSpec((1, b_tile, M), lambda b: (b, 0, 0)),
            pl.BlockSpec(memory_space=pltpu.MemorySpace.SMEM),    # wc (flat 1-D)
            pl.BlockSpec(memory_space=pltpu.MemorySpace.SMEM),    # bc
            pl.BlockSpec((F, E), lambda b: (0, 0)),
            pl.BlockSpec((1, E), lambda b: (0, 0)),
            pl.BlockSpec((E, H2), lambda b: (0, 0)),
            pl.BlockSpec((1, H2), lambda b: (0, 0)),
            pl.BlockSpec((H2, O), lambda b: (0, 0)),
            pl.BlockSpec((1, O), lambda b: (0, 0)),
        ],
        out_specs=pl.BlockSpec((1, b_tile, O), lambda b: (b, 0, 0)),
        compiler_params=pltpu.CompilerParams(
            dimension_semantics=("parallel",),                    # v7x: 2 TCs
            vmem_limit_bytes=32 * 1024 * 1024),
    )(patches, pool_bias, wc_flat, bc,
      params['w1'].astype(matmul_dtype),
      params['b1'].reshape(1, E).astype(jnp.float32),
      params['w2'].astype(matmul_dtype),
      params['b2'].reshape(1, H2).astype(jnp.float32),
      params['w3'].astype(matmul_dtype),
      params['b3'].reshape(1, O).astype(jnp.float32))

    return out.reshape(bs_pad, O)[:bs]


# ----------------------------- pure-JAX reference ---------------------------

def reference_forward(x, mask, params):
    bs, S, d, h, w = x.shape
    xi = x.reshape(bs * S, d, h, w)
    conv = jax.lax.conv_general_dilated(
        xi, params['wc'], window_strides=(1, 1), padding=((1, 1), (1, 1)),
        dimension_numbers=('NCHW', 'OIHW', 'NCHW'))
    conv = jnp.tanh(conv + params['bc'][None, :, None, None])
    flat = conv.reshape(bs * S, -1)
    emb = flat @ params['w1'] + params['b1']
    emb = emb.reshape(bs, S, -1)
    m = (1.0 - mask[:, :, None]) * -1e10
    pooled = jnp.max(emb + m, axis=1)
    hdn = jnp.tanh(pooled @ params['w2'] + params['b2'])
    return hdn @ params['w3'] + params['b3']


# ----------------------------- main -----------------------------------------

if __name__ == "__main__":
    # Small shapes consistent with the module (entity_size=[d, h, w]).
    bs, set_size = 4, 4
    d, h, w = 1, 8, 8
    channels = 3                     # EmbedConv conv out-channels
    embed_features = 20
    output_dim = 1
    F = channels * h * w

    key = jax.random.PRNGKey(0)
    ks = jax.random.split(key, 10)

    params = {
        'wc': 0.1 * jax.random.normal(ks[0], (channels, d, 3, 3), jnp.float32),
        'bc': 0.1 * jax.random.normal(ks[1], (channels,), jnp.float32),
        'w1': 0.1 * jax.random.normal(ks[2], (F, embed_features), jnp.float32),
        'b1': 0.1 * jax.random.normal(ks[3], (embed_features,), jnp.float32),
        'w2': 0.1 * jax.random.normal(ks[4], (embed_features, 2 * embed_features), jnp.float32),
        'b2': 0.1 * jax.random.normal(ks[5], (2 * embed_features,), jnp.float32),
        'w3': 0.1 * jax.random.normal(ks[6], (2 * embed_features, output_dim), jnp.float32),
        'b3': 0.1 * jax.random.normal(ks[7], (output_dim,), jnp.float32),
    }

    x = jax.random.normal(ks[8], (bs, set_size, d, h, w), jnp.float32)
    mask = jnp.array([[1., 1., 1., 0.],
                      [1., 0., 1., 1.],
                      [1., 1., 0., 0.],
                      [0., 1., 1., 1.]], jnp.float32)

    ref = jax.block_until_ready(reference_forward(x, mask, params))

    # f32 path (tight check).
    fwd_f32 = jax.jit(functools.partial(image_deepset_forward,
                                        b_tile=2, matmul_dtype=jnp.float32))
    out_f32 = jax.block_until_ready(fwd_f32(x, mask, params))
    assert out_f32.shape == (bs, output_dim)
    assert jnp.allclose(out_f32, ref, atol=1e-4, rtol=1e-4), (out_f32, ref)

    # bf16 matmul operands (f32 accumulation) -- recommended on v6e/v7x.
    fwd_bf16 = jax.jit(functools.partial(image_deepset_forward,
                                         b_tile=2, matmul_dtype=jnp.bfloat16))
    out_bf16 = jax.block_until_ready(fwd_bf16(x, mask, params))
    assert jnp.allclose(out_bf16, ref, atol=5e-2, rtol=5e-2), (out_bf16, ref)

    print("KERNEL_OK")
</pallas_src>

<mosaic_0001>
module attributes {stable_mosaic.version = 11 : i64} {
  func.func @_fused_deepset_kernel(%arg0: i32, %arg1: memref<1x9x8x64xf32, #tpu.memory_space<vmem>>, %arg2: memref<1x2x8xf32, #tpu.memory_space<vmem>>, %arg3: memref<27xf32, #tpu.memory_space<smem>>, %arg4: memref<3xf32, #tpu.memory_space<smem>>, %arg5: memref<192x20xf32, #tpu.memory_space<vmem>>, %arg6: memref<1x20xf32, #tpu.memory_space<vmem>>, %arg7: memref<20x40xf32, #tpu.memory_space<vmem>>, %arg8: memref<1x40xf32, #tpu.memory_space<vmem>>, %arg9: memref<40x1xf32, #tpu.memory_space<vmem>>, %arg10: memref<1x1xf32, #tpu.memory_space<vmem>>, %arg11: memref<1x2x1xf32, #tpu.memory_space<vmem>>) attributes {dimension_semantics = [#tpu.dimension_semantics<parallel>], iteration_bounds = array<i64: 2>, scalar_prefetch = 0 : i64, scratch_operands = 0 : i64, tpu.core_type = #tpu.core_type<tc>, window_params = [{transform_indices = @transform_0, window_bounds = array<i64: 1, 9, 8, 64>}, {transform_indices = @transform_1, window_bounds = array<i64: 1, 2, 8>}, {transform_indices = @transform_2, window_bounds = array<i64: 27>}, {transform_indices = @transform_3, window_bounds = array<i64: 3>}, {pipeline_mode = #tpu.pipeline_mode<synchronous>, transform_indices = @transform_4, window_bounds = array<i64: 192, 20>}, {pipeline_mode = #tpu.pipeline_mode<synchronous>, transform_indices = @transform_5, window_bounds = array<i64: 1, 20>}, {pipeline_mode = #tpu.pipeline_mode<synchronous>, transform_indices = @transform_6, window_bounds = array<i64: 20, 40>}, {pipeline_mode = #tpu.pipeline_mode<synchronous>, transform_indices = @transform_7, window_bounds = array<i64: 1, 40>}, {pipeline_mode = #tpu.pipeline_mode<synchronous>, transform_indices = @transform_8, window_bounds = array<i64: 40, 1>}, {pipeline_mode = #tpu.pipeline_mode<synchronous>, transform_indices = @transform_9, window_bounds = array<i64: 1, 1>}, {transform_indices = @transform_10, window_bounds = array<i64: 1, 2, 1>}]} {
    %c0 = arith.constant 0 : index
    %c0_0 = arith.constant 0 : index
    %c0_1 = arith.constant 0 : index
    %c0_2 = arith.constant 0 : index
    %0 = vector.load %arg1[%c0, %c0_0, %c0_1, %c0_2] : memref<1x9x8x64xf32, #tpu.memory_space<vmem>>, vector<1x1x8x64xf32>
    %1 = vector.shape_cast %0 : vector<1x1x8x64xf32> to vector<8x64xf32>
    %c0_3 = arith.constant 0 : index
    %c1 = arith.constant 1 : index
    %c0_4 = arith.constant 0 : index
    %c0_5 = arith.constant 0 : index
    %2 = vector.load %arg1[%c0_3, %c1, %c0_4, %c0_5] : memref<1x9x8x64xf32, #tpu.memory_space<vmem>>, vector<1x1x8x64xf32>
    %3 = vector.shape_cast %2 : vector<1x1x8x64xf32> to vector<8x64xf32>
    %c0_6 = arith.constant 0 : index
    %c2 = arith.constant 2 : index
    %c0_7 = arith.constant 0 : index
    %c0_8 = arith.constant 0 : index
    %4 = vector.load %arg1[%c0_6, %c2, %c0_7, %c0_8] : memref<1x9x8x64xf32, #tpu.memory_space<vmem>>, vector<1x1x8x64xf32>
    %5 = vector.shape_cast %4 : vector<1x1x8x64xf32> to vector<8x64xf32>
    %c0_9 = arith.constant 0 : index
    %c3 = arith.constant 3 : index
    %c0_10 = arith.constant 0 : index
    %c0_11 = arith.constant 0 : index
    %6 = vector.load %arg1[%c0_9, %c3, %c0_10, %c0_11] : memref<1x9x8x64xf32, #tpu.memory_space<vmem>>, vector<1x1x8x64xf32>
    %7 = vector.shape_cast %6 : vector<1x1x8x64xf32> to vector<8x64xf32>
    %c0_12 = arith.constant 0 : index
    %c4 = arith.constant 4 : index
    %c0_13 = arith.constant 0 : index
    %c0_14 = arith.constant 0 : index
    %8 = vector.load %arg1[%c0_12, %c4, %c0_13, %c0_14] : memref<1x9x8x64xf32, #tpu.memory_space<vmem>>, vector<1x1x8x64xf32>
    %9 = vector.shape_cast %8 : vector<1x1x8x64xf32> to vector<8x64xf32>
    %c0_15 = arith.constant 0 : index
    %c5 = arith.constant 5 : index
    %c0_16 = arith.constant 0 : index
    %c0_17 = arith.constant 0 : index
    %10 = vector.load %arg1[%c0_15, %c5, %c0_16, %c0_17] : memref<1x9x8x64xf32, #tpu.memory_space<vmem>>, vector<1x1x8x64xf32>
    %11 = vector.shape_cast %10 : vector<1x1x8x64xf32> to vector<8x64xf32>
    %c0_18 = arith.constant 0 : index
    %c6 = arith.constant 6 : index
    %c0_19 = arith.constant 0 : index
    %c0_20 = arith.constant 0 : index
    %12 = vector.load %arg1[%c0_18, %c6, %c0_19, %c0_20] : memref<1x9x8x64xf32, #tpu.memory_space<vmem>>, vector<1x1x8x64xf32>
    %13 = vector.shape_cast %12 : vector<1x1x8x64xf32> to vector<8x64xf32>
    %c0_21 = arith.constant 0 : index
    %c7 = arith.constant 7 : index
    %c0_22 = arith.constant 0 : index
    %c0_23 = arith.constant 0 : index
    %14 = vector.load %arg1[%c0_21, %c7, %c0_22, %c0_23] : memref<1x9x8x64xf32, #tpu.memory_space<vmem>>, vector<1x1x8x64xf32>
    %15 = vector.shape_cast %14 : vector<1x1x8x64xf32> to vector<8x64xf32>
    %c0_24 = arith.constant 0 : index
    %c8 = arith.constant 8 : index
    %c0_25 = arith.constant 0 : index
    %c0_26 = arith.constant 0 : index
    %16 = vector.load %arg1[%c0_24, %c8, %c0_25, %c0_26] : memref<1x9x8x64xf32, #tpu.memory_space<vmem>>, vector<1x1x8x64xf32>
    %17 = vector.shape_cast %16 : vector<1x1x8x64xf32> to vector<8x64xf32>
    %c0_27 = arith.constant 0 : index
    %18 = memref.load %arg3[%c0_27] : memref<27xf32, #tpu.memory_space<smem>>
    %19 = vector.broadcast %18 : f32 to vector<8x64xf32>
    %20 = arith.mulf %1, %19 : vector<8x64xf32>
    %c1_28 = arith.constant 1 : index
    %21 = memref.load %arg3[%c1_28] : memref<27xf32, #tpu.memory_space<smem>>
    %22 = vector.broadcast %21 : f32 to vector<8x64xf32>
    %23 = arith.mulf %3, %22 : vector<8x64xf32>
    %24 = arith.addf %20, %23 : vector<8x64xf32>
    %c2_29 = arith.constant 2 : index
    %25 = memref.load %arg3[%c2_29] : memref<27xf32, #tpu.memory_space<smem>>
    %26 = vector.broadcast %25 : f32 to vector<8x64xf32>
    %27 = arith.mulf %5, %26 : vector<8x64xf32>
    %28 = arith.addf %24, %27 : vector<8x64xf32>
    %c3_30 = arith.constant 3 : index
    %29 = memref.load %arg3[%c3_30] : memref<27xf32, #tpu.memory_space<smem>>
    %30 = vector.broadcast %29 : f32 to vector<8x64xf32>
    %31 = arith.mulf %7, %30 : vector<8x64xf32>
    %32 = arith.addf %28, %31 : vector<8x64xf32>
    %c4_31 = arith.constant 4 : index
    %33 = memref.load %arg3[%c4_31] : memref<27xf32, #tpu.memory_space<smem>>
    %34 = vector.broadcast %33 : f32 to vector<8x64xf32>
    %35 = arith.mulf %9, %34 : vector<8x64xf32>
    %36 = arith.addf %32, %35 : vector<8x64xf32>
    %c5_32 = arith.constant 5 : index
    %37 = memref.load %arg3[%c5_32] : memref<27xf32, #tpu.memory_space<smem>>
    %38 = vector.broadcast %37 : f32 to vector<8x64xf32>
    %39 = arith.mulf %11, %38 : vector<8x64xf32>
    %40 = arith.addf %36, %39 : vector<8x64xf32>
    %c6_33 = arith.constant 6 : index
    %41 = memref.load %arg3[%c6_33] : memref<27xf32, #tpu.memory_space<smem>>
    %42 = vector.broadcast %41 : f32 to vector<8x64xf32>
    %43 = arith.mulf %13, %42 : vector<8x64xf32>
    %44 = arith.addf %40, %43 : vector<8x64xf32>
    %c7_34 = arith.constant 7 : index
    %45 = memref.load %arg3[%c7_34] : memref<27xf32, #tpu.memory_space<smem>>
    %46 = vector.broadcast %45 : f32 to vector<8x64xf32>
    %47 = arith.mulf %15, %46 : vector<8x64xf32>
    %48 = arith.addf %44, %47 : vector<8x64xf32>
    %c8_35 = arith.constant 8 : index
    %49 = memref.load %arg3[%c8_35] : memref<27xf32, #tpu.memory_space<smem>>
    %50 = vector.broadcast %49 : f32 to vector<8x64xf32>
    %51 = arith.mulf %17, %50 : vector<8x64xf32>
    %52 = arith.addf %48, %51 : vector<8x64xf32>
    %c0_36 = arith.constant 0 : index
    %53 = memref.load %arg4[%c0_36] : memref<3xf32, #tpu.memory_space<smem>>
    %54 = vector.broadcast %53 : f32 to vector<8x64xf32>
    %55 = arith.addf %52, %54 : vector<8x64xf32>
    %56 = math.tanh %55 : vector<8x64xf32>
    %c9 = arith.constant 9 : index
    %57 = memref.load %arg3[%c9] : memref<27xf32, #tpu.memory_space<smem>>
    %58 = vector.broadcast %57 : f32 to vector<8x64xf32>
    %59 = arith.mulf %1, %58 : vector<8x64xf32>
    %c10 = arith.constant 10 : index
    %60 = memref.load %arg3[%c10] : memref<27xf32, #tpu.memory_space<smem>>
    %61 = vector.broadcast %60 : f32 to vector<8x64xf32>
    %62 = arith.mulf %3, %61 : vector<8x64xf32>
    %63 = arith.addf %59, %62 : vector<8x64xf32>
    %c11 = arith.constant 11 : index
    %64 = memref.load %arg3[%c11] : memref<27xf32, #tpu.memory_space<smem>>
    %65 = vector.broadcast %64 : f32 to vector<8x64xf32>
    %66 = arith.mulf %5, %65 : vector<8x64xf32>
    %67 = arith.addf %63, %66 : vector<8x64xf32>
    %c12 = arith.constant 12 : index
    %68 = memref.load %arg3[%c12] : memref<27xf32, #tpu.memory_space<smem>>
    %69 = vector.broadcast %68 : f32 to vector<8x64xf32>
    %70 = arith.mulf %7, %69 : vector<8x64xf32>
    %71 = arith.addf %67, %70 : vector<8x64xf32>
    %c13 = arith.constant 13 : index
    %72 = memref.load %arg3[%c13] : memref<27xf32, #tpu.memory_space<smem>>
    %73 = vector.broadcast %72 : f32 to vector<8x64xf32>
    %74 = arith.mulf %9, %73 : vector<8x64xf32>
    %75 = arith.addf %71, %74 : vector<8x64xf32>
    %c14 = arith.constant 14 : index
    %76 = memref.load %arg3[%c14] : memref<27xf32, #tpu.memory_space<smem>>
    %77 = vector.broadcast %76 : f32 to vector<8x64xf32>
    %78 = arith.mulf %11, %77 : vector<8x64xf32>
    %79 = arith.addf %75, %78 : vector<8x64xf32>
    %c15 = arith.constant 15 : index
    %80 = memref.load %arg3[%c15] : memref<27xf32, #tpu.memory_space<smem>>
    %81 = vector.broadcast %80 : f32 to vector<8x64xf32>
    %82 = arith.mulf %13, %81 : vector<8x64xf32>
    %83 = arith.addf %79, %82 : vector<8x64xf32>
    %c16 = arith.constant 16 : index
    %84 = memref.load %arg3[%c16] : memref<27xf32, #tpu.memory_space<smem>>
    %85 = vector.broadcast %84 : f32 to vector<8x64xf32>
    %86 = arith.mulf %15, %85 : vector<8x64xf32>
    %87 = arith.addf %83, %86 : vector<8x64xf32>
    %c17 = arith.constant 17 : index
    %88 = memref.load %arg3[%c17] : memref<27xf32, #tpu.memory_space<smem>>
    %89 = vector.broadcast %88 : f32 to vector<8x64xf32>
    %90 = arith.mulf %17, %89 : vector<8x64xf32>
    %91 = arith.addf %87, %90 : vector<8x64xf32>
    %c1_37 = arith.constant 1 : index
    %92 = memref.load %arg4[%c1_37] : memref<3xf32, #tpu.memory_space<smem>>
    %93 = vector.broadcast %92 : f32 to vector<8x64xf32>
    %94 = arith.addf %91, %93 : vector<8x64xf32>
    %95 = math.tanh %94 : vector<8x64xf32>
    %c18 = arith.constant 18 : index
    %96 = memref.load %arg3[%c18] : memref<27xf32, #tpu.memory_space<smem>>
    %97 = vector.broadcast %96 : f32 to vector<8x64xf32>
    %98 = arith.mulf %1, %97 : vector<8x64xf32>
    %c19 = arith.constant 19 : index
    %99 = memref.load %arg3[%c19] : memref<27xf32, #tpu.memory_space<smem>>
    %100 = vector.broadcast %99 : f32 to vector<8x64xf32>
    %101 = arith.mulf %3, %100 : vector<8x64xf32>
    %102 = arith.addf %98, %101 : vector<8x64xf32>
    %c20 = arith.constant 20 : index
    %103 = memref.load %arg3[%c20] : memref<27xf32, #tpu.memory_space<smem>>
    %104 = vector.broadcast %103 : f32 to vector<8x64xf32>
    %105 = arith.mulf %5, %104 : vector<8x64xf32>
    %106 = arith.addf %102, %105 : vector<8x64xf32>
    %c21 = arith.constant 21 : index
    %107 = memref.load %arg3[%c21] : memref<27xf32, #tpu.memory_space<smem>>
    %108 = vector.broadcast %107 : f32 to vector<8x64xf32>
    %109 = arith.mulf %7, %108 : vector<8x64xf32>
    %110 = arith.addf %106, %109 : vector<8x64xf32>
    %c22 = arith.constant 22 : index
    %111 = memref.load %arg3[%c22] : memref<27xf32, #tpu.memory_space<smem>>
    %112 = vector.broadcast %111 : f32 to vector<8x64xf32>
    %113 = arith.mulf %9, %112 : vector<8x64xf32>
    %114 = arith.addf %110, %113 : vector<8x64xf32>
    %c23 = arith.constant 23 : index
    %115 = memref.load %arg3[%c23] : memref<27xf32, #tpu.memory_space<smem>>
    %116 = vector.broadcast %115 : f32 to vector<8x64xf32>
    %117 = arith.mulf %11, %116 : vector<8x64xf32>
    %118 = arith.addf %114, %117 : vector<8x64xf32>
    %c24 = arith.constant 24 : index
    %119 = memref.load %arg3[%c24] : memref<27xf32, #tpu.memory_space<smem>>
    %120 = vector.broadcast %119 : f32 to vector<8x64xf32>
    %121 = arith.mulf %13, %120 : vector<8x64xf32>
    %122 = arith.addf %118, %121 : vector<8x64xf32>
    %c25 = arith.constant 25 : index
    %123 = memref.load %arg3[%c25] : memref<27xf32, #tpu.memory_space<smem>>
    %124 = vector.broadcast %123 : f32 to vector<8x64xf32>
    %125 = arith.mulf %15, %124 : vector<8x64xf32>
    %126 = arith.addf %122, %125 : vector<8x64xf32>
    %c26 = arith.constant 26 : index
    %127 = memref.load %arg3[%c26] : memref<27xf32, #tpu.memory_space<smem>>
    %128 = vector.broadcast %127 : f32 to vector<8x64xf32>
    %129 = arith.mulf %17, %128 : vector<8x64xf32>
    %130 = arith.addf %126, %129 : vector<8x64xf32>
    %c2_38 = arith.constant 2 : index
    %131 = memref.load %arg4[%c2_38] : memref<3xf32, #tpu.memory_space<smem>>
    %132 = vector.broadcast %131 : f32 to vector<8x64xf32>
    %133 = arith.addf %130, %132 : vector<8x64xf32>
    %134 = math.tanh %133 : vector<8x64xf32>
    %135 = tpu.concatenate %56, %95, %134 in 1 : vector<8x64xf32>, vector<8x64xf32>, vector<8x64xf32> -> vector<8x192xf32>
    %c0_39 = arith.constant 0 : index
    %c0_40 = arith.constant 0 : index
    %136 = vector.load %arg5[%c0_39, %c0_40] : memref<192x20xf32, #tpu.memory_space<vmem>>, vector<192x20xf32>
    %cst = arith.constant dense<0.000000e+00> : vector<8x20xf32>
    %137 = tpu.matmul %135, %136, %cst {dimension_numbers = #tpu.dot_dimension_numbers<[1], [0], [0], [1], [0, 0, 1, 1], [], []>} : vector<8x192xf32>, vector<192x20xf32>, vector<8x20xf32> -> vector<8x20xf32>
    %c0_41 = arith.constant 0 : index
    %c0_42 = arith.constant 0 : index
    %138 = vector.load %arg6[%c0_41, %c0_42] : memref<1x20xf32, #tpu.memory_space<vmem>>, vector<1x20xf32>
    %139 = vector.broadcast %138 : vector<1x20xf32> to vector<8x20xf32>
    %140 = arith.addf %137, %139 : vector<8x20xf32>
    %141 = vector.shape_cast %140 : vector<8x20xf32> to vector<1x8x20xf32>
    %c0_43 = arith.constant 0 : index
    %c0_44 = arith.constant 0 : index
    %c0_45 = arith.constant 0 : index
    %142 = vector.load %arg2[%c0_43, %c0_44, %c0_45] : memref<1x2x8xf32, #tpu.memory_space<vmem>>, vector<1x2x8xf32>
    %143 = vector.shape_cast %142 : vector<1x2x8xf32> to vector<2x8xf32>
    %144 = vector.shape_cast %143 : vector<2x8xf32> to vector<2x8x1xf32>
    %145 = vector.broadcast %141 : vector<1x8x20xf32> to vector<2x8x20xf32>
    %146 = vector.broadcast %144 : vector<2x8x1xf32> to vector<2x8x20xf32>
    %147 = arith.addf %145, %146 : vector<2x8x20xf32>
    %cst_46 = arith.constant dense<0xFF800000> : vector<2x20xf32>
    %148 = vector.multi_reduction <maximumf>, %147, %cst_46 [1] : vector<2x8x20xf32> to vector<2x20xf32>
    %c0_47 = arith.constant 0 : index
    %c0_48 = arith.constant 0 : index
    %149 = vector.load %arg7[%c0_47, %c0_48] : memref<20x40xf32, #tpu.memory_space<vmem>>, vector<20x40xf32>
    %cst_49 = arith.constant dense<0.000000e+00> : vector<2x40xf32>
    %150 = tpu.matmul %148, %149, %cst_49 {dimension_numbers = #tpu.dot_dimension_numbers<[1], [0], [0], [1], [0, 0, 1, 1], [], []>} : vector<2x20xf32>, vector<20x40xf32>, vector<2x40xf32> -> vector<2x40xf32>
    %c0_50 = arith.constant 0 : index
    %c0_51 = arith.constant 0 : index
    %151 = vector.load %arg8[%c0_50, %c0_51] : memref<1x40xf32, #tpu.memory_space<vmem>>, vector<1x40xf32>
    %152 = vector.broadcast %151 : vector<1x40xf32> to vector<2x40xf32>
    %153 = arith.addf %150, %152 : vector<2x40xf32>
    %154 = math.tanh %153 : vector<2x40xf32>
    %c0_52 = arith.constant 0 : index
    %c0_53 = arith.constant 0 : index
    %155 = vector.load %arg9[%c0_52, %c0_53] : memref<40x1xf32, #tpu.memory_space<vmem>>, vector<40x1xf32>
    %cst_54 = arith.constant dense<0.000000e+00> : vector<2x1xf32>
    %156 = tpu.matmul %154, %155, %cst_54 {dimension_numbers = #tpu.dot_dimension_numbers<[1], [0], [0], [1], [0, 0, 1, 1], [], []>} : vector<2x40xf32>, vector<40x1xf32>, vector<2x1xf32> -> vector<2x1xf32>
    %c0_55 = arith.constant 0 : index
    %c0_56 = arith.constant 0 : index
    %157 = vector.load %arg10[%c0_55, %c0_56] : memref<1x1xf32, #tpu.memory_space<vmem>>, vector<1x1xf32>
    %158 = vector.broadcast %157 : vector<1x1xf32> to vector<2x1xf32>
    %159 = arith.addf %156, %158 : vector<2x1xf32>
    %c0_57 = arith.constant 0 : index
    %c0_58 = arith.constant 0 : index
    %c0_59 = arith.constant 0 : index
    %160 = vector.load %arg11[%c0_57, %c0_58, %c0_59] : memref<1x2x1xf32, #tpu.memory_space<vmem>>, vector<1x2x1xf32>
    %161 = vector.shape_cast %160 : vector<1x2x1xf32> to vector<2x1xf32>
    %162 = vector.shape_cast %159 : vector<2x1xf32> to vector<1x2x1xf32>
    tpu.vector_store %arg11[%c0_57, %c0_58, %c0_59], %162 {strides = array<i32>} : memref<1x2x1xf32, #tpu.memory_space<vmem>>, vector<1x2x1xf32>,
    return
  }
  func.func @transform_0(%arg0: i32) -> (i32, i32, i32, i32) {
    %c0_i32 = arith.constant 0 : i32
    %c0_i32_0 = arith.constant 0 : i32
    %c0_i32_1 = arith.constant 0 : i32
    %c0_i32_2 = arith.constant 0 : i32
    return %arg0, %c0_i32, %c0_i32_0, %c0_i32_1 : i32, i32, i32, i32
  }
  func.func @transform_1(%arg0: i32) -> (i32, i32, i32) {
    %c0_i32 = arith.constant 0 : i32
    %c0_i32_0 = arith.constant 0 : i32
    %c0_i32_1 = arith.constant 0 : i32
    return %arg0, %c0_i32, %c0_i32_0 : i32, i32, i32
  }
  func.func @transform_2(%arg0: i32) -> i32 {
    %c0_i32 = arith.constant 0 : i32
    %c0_i32_0 = arith.constant 0 : i32
    return %c0_i32 : i32
  }
  func.func @transform_3(%arg0: i32) -> i32 {
    %c0_i32 = arith.constant 0 : i32
    %c0_i32_0 = arith.constant 0 : i32
    return %c0_i32 : i32
  }
  func.func @transform_4(%arg0: i32) -> (i32, i32) {
    %c0_i32 = arith.constant 0 : i32
    %c0_i32_0 = arith.constant 0 : i32
    %c0_i32_1 = arith.constant 0 : i32
    return %c0_i32, %c0_i32_0 : i32, i32
  }
  func.func @transform_5(%arg0: i32) -> (i32, i32) {
    %c0_i32 = arith.constant 0 : i32
    %c0_i32_0 = arith.constant 0 : i32
    %c0_i32_1 = arith.constant 0 : i32
    return %c0_i32, %c0_i32_0 : i32, i32
  }
  func.func @transform_6(%arg0: i32) -> (i32, i32) {
    %c0_i32 = arith.constant 0 : i32
    %c0_i32_0 = arith.constant 0 : i32
    %c0_i32_1 = arith.constant 0 : i32
    return %c0_i32, %c0_i32_0 : i32, i32
  }
  func.func @transform_7(%arg0: i32) -> (i32, i32) {
    %c0_i32 = arith.constant 0 : i32
    %c0_i32_0 = arith.constant 0 : i32
    %c0_i32_1 = arith.constant 0 : i32
    return %c0_i32, %c0_i32_0 : i32, i32
  }
  func.func @transform_8(%arg0: i32) -> (i32, i32) {
    %c0_i32 = arith.constant 0 : i32
    %c0_i32_0 = arith.constant 0 : i32
    %c0_i32_1 = arith.constant 0 : i32
    return %c0_i32, %c0_i32_0 : i32, i32
  }
  func.func @transform_9(%arg0: i32) -> (i32, i32) {
    %c0_i32 = arith.constant 0 : i32
    %c0_i32_0 = arith.constant 0 : i32
    %c0_i32_1 = arith.constant 0 : i32
    return %c0_i32, %c0_i32_0 : i32, i32
  }
  func.func @transform_10(%arg0: i32) -> (i32, i32, i32) {
    %c0_i32 = arith.constant 0 : i32
    %c0_i32_0 = arith.constant 0 : i32
    %c0_i32_1 = arith.constant 0 : i32
    return %arg0, %c0_i32, %c0_i32_0 : i32, i32, i32
  }
}

</mosaic_0001>

<llo_original>
// kernel: squeeze.9
$region0: #{squeeze.9}
  %s0 = inlined_call_operand.vmem [shape: f32[2,8,1,8,8], index: 0, kind: input, shape index: {}]
  %s1 = inlined_call_operand.vmem [shape: f32[2,1,8,64], index: 1, kind: output, shape index: {}]
  %v2 = vld [vmem:[%s0] ss:$8 sm:$0xf]
  %v3 = vld [vmem:[%s0] ss:$8 sm:$0xf0]
  %vm4 = vcmask 1047556
  %v5 = vsel %vm4, %v3, %v2
  %vm6 = vcmask 64512
  %7 = vst.msk [vmem:[%s1] sm:$0xff] %vm6, %v5
  %s8 = scalar_lea.vmem %s0, 64
  %v9 = vld [vmem:[%s8] ss:$8 sm:$0xf]
  %s10 = scalar_lea.vmem %s0, 64
  %v11 = vld [vmem:[%s10] ss:$8 sm:$0xf0]
  %vm12 = vcmask 1047556
  %v13 = vsel %vm12, %v11, %v9
  %vm14 = vcmask 64512
  %s15 = scalar_lea.vmem %s1, 8
  %16 = vst.msk [vmem:[%s15] sm:$0xff] %vm14, %v13
  %s17 = scalar_lea.vmem %s0, 7
  %v18 = vld [vmem:[%s17] ss:$8 sm:$0xf]
  %s19 = scalar_lea.vmem %s0, 7
  %v20 = vld [vmem:[%s19] ss:$8 sm:$0xf0]
  %vm21 = vcmask 1047556
  %v22 = vsel %vm21, %v20, %v18
  %23 = vrot.lane.b32.xlu0 %v22, 56
  %v24 = vpop.permute.xlu0 %23
  %vm25 = vcmask 523712
  %26 = vst.msk [vmem:[%s1] sm:$0xff] %vm25, %v24
  %s27 = scalar_lea.vmem %s0, 71
  %v28 = vld [vmem:[%s27] ss:$8 sm:$0xf]
  %s29 = scalar_lea.vmem %s0, 71
  %v30 = vld [vmem:[%s29] ss:$8 sm:$0xf0]
  %vm31 = vcmask 1047556
  %v32 = vsel %vm31, %v30, %v28
  %33 = vrot.lane.b32.xlu0 %v32, 56
  %v34 = vpop.permute.xlu0 %33
  %vm35 = vcmask 523712
  %s36 = scalar_lea.vmem %s1, 8
  %37 = vst.msk [vmem:[%s36] sm:$0xff] %vm35, %v34
  %s38 = scalar_lea.vmem %s0, 6
  %v39 = vld [vmem:[%s38] ss:$8 sm:$0xf]
  %s40 = scalar_lea.vmem %s0, 6
  %v41 = vld [vmem:[%s40] ss:$8 sm:$0xf0]
  %vm42 = vcmask 1047556
  %v43 = vsel %vm42, %v41, %v39
  %44 = vrot.lane.b32.xlu0 %v43, 48
  %v45 = vpop.permute.xlu0 %44
  %vm46 = vcmask 458112
  %47 = vst.msk [vmem:[%s1] sm:$0xff] %vm46, %v45
  %s48 = scalar_lea.vmem %s0, 70
  %v49 = vld [vmem:[%s48] ss:$8 sm:$0xf]
  %s50 = scalar_lea.vmem %s0, 70
  %v51 = vld [vmem:[%s50] ss:$8 sm:$0xf0]
  %vm52 = vcmask 1047556
  %v53 = vsel %vm52, %v51, %v49
  %54 = vrot.lane.b32.xlu0 %v53, 48
  %v55 = vpop.permute.xlu0 %54
  %vm56 = vcmask 458112
  %s57 = scalar_lea.vmem %s1, 8
  %58 = vst.msk [vmem:[%s57] sm:$0xff] %vm56, %v55
  %s59 = scalar_lea.vmem %s0, 5
  %v60 = vld [vmem:[%s59] ss:$8 sm:$0xf]
  %s61 = scalar_lea.vmem %s0, 5
  %v62 = vld [vmem:[%s61] ss:$8 sm:$0xf0]
  %vm63 = vcmask 1047556
  %v64 = vsel %vm63, %v62, %v60
  %65 = vrot.lane.b32.xlu0 %v64, 40
  %v66 = vpop.permute.xlu0 %65
  %vm67 = vcmask 392512
  %68 = vst.msk [vmem:[%s1] sm:$0xff] %vm67, %v66
  %s69 = scalar_lea.vmem %s0, 69
  %v70 = vld [vmem:[%s69] ss:$8 sm:$0xf]
  %s71 = scalar_lea.vmem %s0, 69
  %v72 = vld [vmem:[%s71] ss:$8 sm:$0xf0]
  %vm73 = vcmask 1047556
  %v74 = vsel %vm73, %v72, %v70
  %75 = vrot.lane.b32.xlu0 %v74, 40
  %v76 = vpop.permute.xlu0 %75
  %vm77 = vcmask 392512
  %s78 = scalar_lea.vmem %s1, 8
  %79 = vst.msk [vmem:[%s78] sm:$0xff] %vm77, %v76
  %s80 = scalar_lea.vmem %s0, 4
  %v81 = vld [vmem:[%s80] ss:$8 sm:$0xf]
  %s82 = scalar_lea.vmem %s0, 4
  %v83 = vld [vmem:[%s82] ss:$8 sm:$0xf0]
  %vm84 = vcmask 1047556
  %v85 = vsel %vm84, %v83, %v81
  %86 = vrot.lane.b32.xlu0 %v85, 32
  %v87 = vpop.permute.xlu0 %86
  %vm88 = vcmask 326912
  %89 = vst.msk [vmem:[%s1] sm:$0xff] %vm88, %v87
  %s90 = scalar_lea.vmem %s0, 68
  %v91 = vld [vmem:[%s90] ss:$8 sm:$0xf]
  %s92 = scalar_lea.vmem %s0, 68
  %v93 = vld [vmem:[%s92] ss:$8 sm:$0xf0]
  %vm94 = vcmask 1047556
  %v95 = vsel %vm94, %v93, %v91
  %96 = vrot.lane.b32.xlu0 %v95, 32
  %v97 = vpop.permute.xlu0 %96
  %vm98 = vcmask 326912
  %s99 = scalar_lea.vmem %s1, 8
  %100 = vst.msk [vmem:[%s99] sm:$0xff] %vm98, %v97
  %s101 = scalar_lea.vmem %s0, 3
  %v102 = vld [vmem:[%s101] ss:$8 sm:$0xf]
  %s103 = scalar_lea.vmem %s0, 3
  %v104 = vld [vmem:[%s103] ss:$8 sm:$0xf0]
  %vm105 = vcmask 1047556
  %v106 = vsel %vm105, %v104, %v102
  %107 = vrot.lane.b32.xlu0 %v106, 24
  %v108 = vpop.permute.xlu0 %107
  %vm109 = vcmask 261312
  %110 = vst.msk [vmem:[%s1] sm:$0xff] %vm109, %v108
  %s111 = scalar_lea.vmem %s0, 67
  %v112 = vld [vmem:[%s111] ss:$8 sm:$0xf]
  %s113 = scalar_lea.vmem %s0, 67
  %v114 = vld [vmem:[%s113] ss:$8 sm:$0xf0]
  %vm115 = vcmask 1047556
  %v116 = vsel %vm115, %v114, %v112
  %117 = vrot.lane.b32.xlu0 %v116, 24
  %v118 = vpop.permute.xlu0 %117
  %vm119 = vcmask 261312
  %s120 = scalar_lea.vmem %s1, 8
  %121 = vst.msk [vmem:[%s120] sm:$0xff] %vm119, %v118
  %s122 = scalar_lea.vmem %s0, 2
  %v123 = vld [vmem:[%s122] ss:$8 sm:$0xf]
  %s124 = scalar_lea.vmem %s0, 2
  %v125 = vld [vmem:[%s124] ss:$8 sm:$0xf0]
  %vm126 = vcmask 1047556
  %v127 = vsel %vm126, %v125, %v123
  %128 = vrot.lane.b32.xlu0 %v127, 16
  %v129 = vpop.permute.xlu0 %128
  %vm130 = vcmask 195712
  %131 = vst.msk [vmem:[%s1] sm:$0xff] %vm130, %v129
  %s132 = scalar_lea.vmem %s0, 66
  %v133 = vld [vmem:[%s132] ss:$8 sm:$0xf]
  %s134 = scalar_lea.vmem %s0, 66
  %v135 = vld [vmem:[%s134] ss:$8 sm:$0xf0]
  %vm136 = vcmask 1047556
  %v137 = vsel %vm136, %v135, %v133
  %138 = vrot.lane.b32.xlu0 %v137, 16
  %v139 = vpop.permute.xlu0 %138
  %vm140 = vcmask 195712
  %s141 = scalar_lea.vmem %s1, 8
  %142 = vst.msk [vmem:[%s141] sm:$0xff] %vm140, %v139
  %s143 = scalar_lea.vmem %s0, 1
  %v144 = vld [vmem:[%s143] ss:$8 sm:$0xf]
  %s145 = scalar_lea.vmem %s0, 1
  %v146 = vld [vmem:[%s145] ss:$8 sm:$0xf0]
  %vm147 = vcmask 1047556
  %v148 = vsel %vm147, %v146, %v144
  %149 = vrot.lane.b32.xlu0 %v148, 8
  %v150 = vpop.permute.xlu0 %149
  %vm151 = vcmask 130112
  %152 = vst.msk [vmem:[%s1] sm:$0xff] %vm151, %v150
  %s153 = scalar_lea.vmem %s0, 65
  %v154 = vld [vmem:[%s153] ss:$8 sm:$0xf]
  %s155 = scalar_lea.vmem %s0, 65
  %v156 = vld [vmem:[%s155] ss:$8 sm:$0xf0]
  %vm157 = vcmask 1047556
  %v158 = vsel %vm157, %v156, %v154
  %159 = vrot.lane.b32.xlu0 %v158, 8
  %v160 = vpop.permute.xlu0 %159
  %vm161 = vcmask 130112
  %s162 = scalar_lea.vmem %s1, 8
  %163 = vst.msk [vmem:[%s162] sm:$0xff] %vm161, %v160

// kernel: image_deepset_forward.1
$region0: #{image_deepset_forward.1}
  #allocation0 [shape = 'u32[]', space=smem, size = 0x4, offset = 0x4, fixed_abs, tag = 'smem constant byte address 0x4 - core index']
  #allocation1 [shape = 'u32[144,128]{1,0:T(1,128)}', space=vmem, size = 0x12000, scoped, tag = 'internal scratch']
  #allocation2 [shape = 'f32[1,1]{1,0:T(1,128)S(1)}', space=vmem, size = 0x200, scoped, tag = 'scoped memory for image_deepset_forward.1']
  %s0 = inlined_call_operand.vmem [shape: f32[2,9,8,64], index: 0, kind: input, shape index: {}]
  %s1 = inlined_call_operand.vmem [shape: f32[2,2,8], index: 1, kind: input, shape index: {}]
  %s2 = inlined_call_operand.vmem [shape: f32[27], index: 2, kind: input, shape index: {}]
  %s3 = inlined_call_operand.vmem [shape: f32[3], index: 3, kind: input, shape index: {}]
  %s4 = inlined_call_operand.vmem [shape: f32[192,20], index: 4, kind: input, shape index: {}]
  %s5 = inlined_call_operand.vmem [shape: f32[1,20], index: 5, kind: input, shape index: {}]
  %s6 = inlined_call_operand.vmem [shape: f32[20,40], index: 6, kind: input, shape index: {}]
  %s7 = inlined_call_operand.vmem [shape: f32[1,40], index: 7, kind: input, shape index: {}]
  %s8 = inlined_call_operand.vmem [shape: f32[40,1], index: 8, kind: input, shape index: {}]
  %s9 = inlined_call_operand.<no memory space> [shape: f32[1,1], index: 9, kind: input, shape index: {}]
  %s10 = inlined_call_operand.vmem [shape: f32[2,2,1], index: 10, kind: output, shape index: {}]
  %s11 = sld [smem:[#allocation0]]
  $region81: #{image_deepset_forward.1} parent=0
    _
  %s13 = ssub.s32 1, %s11
  %s14 = scalar_select 0, %s13, %s11
  %v15 = vstv %s9
  %16 = vst [vmem:[#allocation2] sm:$0x1] %v15
  $region1: #{image_deepset_forward.1} parent=0
    #allocation3 [shape = 'u8[512]{0}', space=smem, size = 0x200, scoped, tag = 'input window, operand 2, single buffered']
    #allocation4 [shape = 's32[2]{0}', space=sflag, size = 0x8, scoped, tag = 'scoped memory for image_deepset_forward.1']
    #allocation5 [shape = 'u8[512]{0}', space=smem, size = 0x200, scoped, tag = 'input window, operand 3, single buffered']
    #allocation6 [shape = 's32[1]{0}', space=sflag, size = 0x4, scoped, tag = 'scoped memory for image_deepset_forward.1']
    %17 = vsyncpa [#allocation4], 0
    %18 = vsyncpa [#allocation6], 0
    loop: start=0, step=1, limit=4
    $region2: #{image_deepset_forward.1} parent=1 // loop_pre_header
      _
    $region3: #{image_deepset_forward.1} parent=1 // loop_header
      %s20 = sphi 0, %s24
      %p21 = scmp.ge.s32.totalorder %s20, 4
      %s30 = sphi 0, %s32
      %s33 = sphi 0, %s30
      %s34 = sphi 0, %s33
      %s50 = sphi 0, %s34
      %s56 = sphi 0, %s58
      %s59 = sphi 0, %s56
      %s60 = sphi 0, %s59
      %s76 = sphi 0, %s60
      %s80 = sphi 0, %s80
      %s82 = sphi 0, %s80
      %s83 = sphi 0, %s82
      %s97 = sphi 0, %s83
      %s101 = sphi 0, %s101
      %s103 = sphi 0, %s101
      %s104 = sphi 0, %s103
      %s118 = sphi 0, %s104
      %s122 = sphi 0, %s122
      %s124 = sphi 0, %s122
      %s125 = sphi 0, %s124
      %s139 = sphi 0, %s125
      %s143 = sphi 0, %s143
      %s145 = sphi 0, %s143
      %s146 = sphi 0, %s145
      %s160 = sphi 0, %s146
      %s164 = sphi 0, %s164
      %s166 = sphi 0, %s164
      %s167 = sphi 0, %s166
      %s181 = sphi 0, %s167
      %s185 = sphi 0, %s185
      %s187 = sphi 0, %s185
      %s188 = sphi 0, %s187
      %s202 = sphi 0, %s188
      %s206 = sphi 0, %s206
      %s208 = sphi 0, %s206
      %s209 = sphi 0, %s208
      %s223 = sphi 0, %s209
      %s227 = sphi 0, %s227
      %s229 = sphi 0, %s227
      %s230 = sphi 0, %s229
      %s244 = sphi 0, %s230
      %s250 = sphi 0, %s252
      %s253 = sphi 0, %s250
      %s254 = sphi 0, %s253
      %s270 = sphi 0, %s254
    $region4: #{image_deepset_forward.1} parent=1 // loop_header_branch
      %23 = sbr.rel (%p21) target = $region8
    $region5: #{image_deepset_forward.1} parent=1 // loop_body
      %s25 = ssub.s32 %s20, 1
      %s26 = ssub.s32 %s20, 2
      %s27 = sadd.s32 %s20, 1
      %s28 = ssub.s32 %s20, %s27
      %p29 = scmp.eq.s32.totalorder %s28, 0
      %s31 = sadd.s32 %s30, 1
      %s32 = scalar_select %p29, %s30, %s31
      %p35 = pneg %p29
      %p36 = scmp.eq.s32.totalorder %s20, 1
      %p37 = por %p35, %p36
      %p38 = scmp.ne.s32.totalorder %s30, %s33
      %p39 = scmp.eq.s32.totalorder %s20, 0
      %p40 = por %p38, %p39
      %p41 = scmp.ne.s32.totalorder %s30, %s33
      %p42 = scmp.eq.s32.totalorder %s25, 1
      %p43 = por %p41, %p42
      %p44 = scmp.ne.s32.totalorder %s33, %s34
      %p45 = scmp.eq.s32.totalorder %s25, 0
      %p46 = por %p44, %p45
      %p47 = scmp.ne.s32.totalorder %s33, %s34
      %p48 = scmp.eq.s32.totalorder %s26, 1
      %p49 = por %p47, %p48
      %p51 = scmp.ne.s32.totalorder %s34, %s50
      %p52 = scmp.eq.s32.totalorder %s26, 0
      %p53 = por %p51, %p52
      %s54 = ssub.s32 %s20, %s27
      %p55 = scmp.eq.s32.totalorder %s54, 0
      %s57 = sadd.s32 %s56, 1
      %s58 = scalar_select %p55, %s56, %s57
      %p61 = pneg %p55
      %p62 = scmp.eq.s32.totalorder %s20, 1
      %p63 = por %p61, %p62
      %p64 = scmp.ne.s32.totalorder %s56, %s59
      %p65 = scmp.eq.s32.totalorder %s20, 0
      %p66 = por %p64, %p65
      %p67 = scmp.ne.s32.totalorder %s56, %s59
      %p68 = scmp.eq.s32.totalorder %s25, 1
      %p69 = por %p67, %p68
      %p70 = scmp.ne.s32.totalorder %s59, %s60
      %p71 = scmp.eq.s32.totalorder %s25, 0
      %p72 = por %p70, %p71
      %p73 = scmp.ne.s32.totalorder %s59, %s60
      %p74 = scmp.eq.s32.totalorder %s26, 1
      %p75 = por %p73, %p74
      %p77 = scmp.ne.s32.totalorder %s60, %s76
      %p78 = scmp.eq.s32.totalorder %s26, 0
      %p79 = por %p77, %p78
      %s81 = sadd.s32 %s80, 1
      %p84 = scmp.eq.s32.totalorder %s20, 1
      %p85 = scmp.ne.s32.totalorder %s80, %s82
      %p86 = scmp.eq.s32.totalorder %s20, 0
      %p87 = por %p85, %p86
      %p88 = scmp.ne.s32.totalorder %s80, %s82
      %p89 = scmp.eq.s32.totalorder %s25, 1
      %p90 = por %p88, %p89
      %p91 = scmp.ne.s32.totalorder %s82, %s83
      %p92 = scmp.eq.s32.totalorder %s25, 0
      %p93 = por %p91, %p92
      %p94 = scmp.ne.s32.totalorder %s82, %s83
      %p95 = scmp.eq.s32.totalorder %s26, 1
      %p96 = por %p94, %p95
      %p98 = scmp.ne.s32.totalorder %s83, %s97
      %p99 = scmp.eq.s32.totalorder %s26, 0
      %p100 = por %p98, %p99
      %s102 = sadd.s32 %s101, 1
      %p105 = scmp.eq.s32.totalorder %s20, 1
      %p106 = scmp.ne.s32.totalorder %s101, %s103
      %p107 = scmp.eq.s32.totalorder %s20, 0
      %p108 = por %p106, %p107
      %p109 = scmp.ne.s32.totalorder %s101, %s103
      %p110 = scmp.eq.s32.totalorder %s25, 1
      %p111 = por %p109, %p110
      %p112 = scmp.ne.s32.totalorder %s103, %s104
      %p113 = scmp.eq.s32.totalorder %s25, 0
      %p114 = por %p112, %p113
      %p115 = scmp.ne.s32.totalorder %s103, %s104
      %p116 = scmp.eq.s32.totalorder %s26, 1
      %p117 = por %p115, %p116
      %p119 = scmp.ne.s32.totalorder %s104, %s118
      %p120 = scmp.eq.s32.totalorder %s26, 0
      %p121 = por %p119, %p120
      %s123 = sadd.s32 %s122, 1
      %p126 = scmp.eq.s32.totalorder %s20, 1
      %p127 = scmp.ne.s32.totalorder %s122, %s124
      %p128 = scmp.eq.s32.totalorder %s20, 0
      %p129 = por %p127, %p128
      %p130 = scmp.ne.s32.totalorder %s122, %s124
      %p131 = scmp.eq.s32.totalorder %s25, 1
      %p132 = por %p130, %p131
      %p133 = scmp.ne.s32.totalorder %s124, %s125
      %p134 = scmp.eq.s32.totalorder %s25, 0
      %p135 = por %p133, %p134
      %p136 = scmp.ne.s32.totalorder %s124, %s125
      %p137 = scmp.eq.s32.totalorder %s26, 1
      %p138 = por %p136, %p137
      %p140 = scmp.ne.s32.totalorder %s125, %s139
      %p141 = scmp.eq.s32.totalorder %s26, 0
      %p142 = por %p140, %p141
      %s144 = sadd.s32 %s143, 1
      %p147 = scmp.eq.s32.totalorder %s20, 1
      %p148 = scmp.ne.s32.totalorder %s143, %s145
      %p149 = scmp.eq.s32.totalorder %s20, 0
      %p150 = por %p148, %p149
      %p151 = scmp.ne.s32.totalorder %s143, %s145
      %p152 = scmp.eq.s32.totalorder %s25, 1
      %p153 = por %p151, %p152
      %p154 = scmp.ne.s32.totalorder %s145, %s146
      %p155 = scmp.eq.s32.totalorder %s25, 0
      %p156 = por %p154, %p155
      %p157 = scmp.ne.s32.totalorder %s145, %s146
      %p158 = scmp.eq.s32.totalorder %s26, 1
      %p159 = por %p157, %p158
      %p161 = scmp.ne.s32.totalorder %s146, %s160
      %p162 = scmp.eq.s32.totalorder %s26, 0
      %p163 = por %p161, %p162
      %s165 = sadd.s32 %s164, 1
      %p168 = scmp.eq.s32.totalorder %s20, 1
      %p169 = scmp.ne.s32.totalorder %s164, %s166
      %p170 = scmp.eq.s32.totalorder %s20, 0
      %p171 = por %p169, %p170
      %p172 = scmp.ne.s32.totalorder %s164, %s166
      %p173 = scmp.eq.s32.totalorder %s25, 1
      %p174 = por %p172, %p173
      %p175 = scmp.ne.s32.totalorder %s166, %s167
      %p176 = scmp.eq.s32.totalorder %s25, 0
      %p177 = por %p175, %p176
      %p178 = scmp.ne.s32.totalorder %s166, %s167
      %p179 = scmp.eq.s32.totalorder %s26, 1
      %p180 = por %p178, %p179
      %p182 = scmp.ne.s32.totalorder %s167, %s181
      %p183 = scmp.eq.s32.totalorder %s26, 0
      %p184 = por %p182, %p183
      %s186 = sadd.s32 %s185, 1
      %p189 = scmp.eq.s32.totalorder %s20, 1
      %p190 = scmp.ne.s32.totalorder %s185, %s187
      %p191 = scmp.eq.s32.totalorder %s20, 0
      %p192 = por %p190, %p191
      %p193 = scmp.ne.s32.totalorder %s185, %s187
      %p194 = scmp.eq.s32.totalorder %s25, 1
      %p195 = por %p193, %p194
      %p196 = scmp.ne.s32.totalorder %s187, %s188
      %p197 = scmp.eq.s32.totalorder %s25, 0
      %p198 = por %p196, %p197
      %p199 = scmp.ne.s32.totalorder %s187, %s188
      %p200 = scmp.eq.s32.totalorder %s26, 1
      %p201 = por %p199, %p200
      %p203 = scmp.ne.s32.totalorder %s188, %s202
      %p204 = scmp.eq.s32.totalorder %s26, 0
      %p205 = por %p203, %p204
      %s207 = sadd.s32 %s206, 1
      %p210 = scmp.eq.s32.totalorder %s20, 1
      %p211 = scmp.ne.s32.totalorder %s206, %s208
      %p212 = scmp.eq.s32.totalorder %s20, 0
      %p213 = por %p211, %p212
      %p214 = scmp.ne.s32.totalorder %s206, %s208
      %p215 = scmp.eq.s32.totalorder %s25, 1
      %p216 = por %p214, %p215
      %p217 = scmp.ne.s32.totalorder %s208, %s209
      %p218 = scmp.eq.s32.totalorder %s25, 0
      %p219 = por %p217, %p218
      %p220 = scmp.ne.s32.totalorder %s208, %s209
      %p221 = scmp.eq.s32.totalorder %s26, 1
      %p222 = por %p220, %p221
      %p224 = scmp.ne.s32.totalorder %s209, %s223
      %p225 = scmp.eq.s32.totalorder %s26, 0
      %p226 = por %p224, %p225
      %s228 = sadd.s32 %s227, 1
      %p231 = scmp.eq.s32.totalorder %s20, 1
      %p232 = scmp.ne.s32.totalorder %s227, %s229
      %p233 = scmp.eq.s32.totalorder %s20, 0
      %p234 = por %p232, %p233
      %p235 = scmp.ne.s32.totalorder %s227, %s229
      %p236 = scmp.eq.s32.totalorder %s25, 1
      %p237 = por %p235, %p236
      %p238 = scmp.ne.s32.totalorder %s229, %s230
      %p239 = scmp.eq.s32.totalorder %s25, 0
      %p240 = por %p238, %p239
      %p241 = scmp.ne.s32.totalorder %s229, %s230
      %p242 = scmp.eq.s32.totalorder %s26, 1
      %p243 = por %p241, %p242
      %p245 = scmp.ne.s32.totalorder %s230, %s244
      %p246 = scmp.eq.s32.totalorder %s26, 0
      %p247 = por %p245, %p246
      %s248 = ssub.s32 %s20, %s27
      %p249 = scmp.eq.s32.totalorder %s248, 0
      %s251 = sadd.s32 %s250, 1
      %s252 = scalar_select %p249, %s250, %s251
      %p255 = pneg %p249
      %p256 = scmp.eq.s32.totalorder %s20, 1
      %p257 = por %p255, %p256
      %p258 = scmp.ne.s32.totalorder %s250, %s253
      %p259 = scmp.eq.s32.totalorder %s20, 0
      %p260 = por %p258, %p259
      %p261 = scmp.ne.s32.totalorder %s250, %s253
      %p262 = scmp.eq.s32.totalorder %s25, 1
      %p263 = por %p261, %p262
      %p264 = scmp.ne.s32.totalorder %s253, %s254
      %p265 = scmp.eq.s32.totalorder %s25, 0
      %p266 = por %p264, %p265
      %p267 = scmp.ne.s32.totalorder %s253, %s254
      %p268 = scmp.eq.s32.totalorder %s26, 1
      %p269 = por %p267, %p268
      %p271 = scmp.ne.s32.totalorder %s254, %s270
      %p272 = scmp.eq.s32.totalorder %s26, 0
      %p273 = por %p271, %p272
      %p274 = scmp.le.s32.totalorder 1, %s20
      %p275 = scmp.lt.s32.totalorder %s20, 3
      %p276 = pnand %p274, %p275
      %p277 = pneg %p276
      // Predicated region
      $region9: #{image_deepset_forward.1} parent=5 // pred_check
        _
      $region10: #{image_deepset_forward.1} parent=5 // pred_check_branch
        %279 = sbr.rel (%p276) target = $region12
      $region11: #{image_deepset_forward.1} parent=5 // pred_region
        %s280 = ssub.s32 %s20, 1
        // Predicated region
        $region13: #{image_deepset_forward.1} parent=11 // pred_check
          %p281 = pneg %p93
        $region14: #{image_deepset_forward.1} parent=11 // pred_check_branch
          %283 = sbr.rel (%p281) target = $region16
        $region15: #{image_deepset_forward.1} parent=11 // pred_region
          %s285 = ssub.s32 16, 16
          %286 = vsyncadd [#allocation4], %s285
          %s288 = sshll.u32 %s2, 4
          %s289 = int_to_ptr.vmem [resolvable:$true] %s288
          %291 = dma.vmem_to_smem %s289, 16, [#allocation3], [#allocation4]
        $region16: #{image_deepset_forward.1} parent=11 // pred_fallthru
          _
        // Predicated region
        $region17: #{image_deepset_forward.1} parent=11 // pred_check
          %p292 = pneg %p114
        $region18: #{image_deepset_forward.1} parent=11 // pred_check_branch
          %294 = sbr.rel (%p292) target = $region20
        $region19: #{image_deepset_forward.1} parent=11 // pred_region
          %s296 = ssub.s32 16, 16
          %297 = vsyncadd [#allocation6], %s296
          %s299 = sshll.u32 %s3, 4
          %s300 = int_to_ptr.vmem [resolvable:$true] %s299
          %302 = dma.vmem_to_smem %s300, 16, [#allocation5], [#allocation6]
        $region20: #{image_deepset_forward.1} parent=11 // pred_fallthru
          _
        // Predicated region
        $region21: #{image_deepset_forward.1} parent=11 // pred_check
          %p303 = pneg %p135
        $region22: #{image_deepset_forward.1} parent=11 // pred_check_branch
          %305 = sbr.rel (%p303) target = $region24
        $region23: #{image_deepset_forward.1} parent=11 // pred_region
          _
        $region24: #{image_deepset_forward.1} parent=11 // pred_fallthru
          _
        // Predicated region
        $region25: #{image_deepset_forward.1} parent=11 // pred_check
          %p306 = pneg %p156
        $region26: #{image_deepset_forward.1} parent=11 // pred_check_branch
          %308 = sbr.rel (%p306) target = $region28
        $region27: #{image_deepset_forward.1} parent=11 // pred_region
          _
        $region28: #{image_deepset_forward.1} parent=11 // pred_fallthru
          _
        // Predicated region
        $region29: #{image_deepset_forward.1} parent=11 // pred_check
          %p309 = pneg %p177
        $region30: #{image_deepset_forward.1} parent=11 // pred_check_branch
          %311 = sbr.rel (%p309) target = $region32
        $region31: #{image_deepset_forward.1} parent=11 // pred_region
          _
        $region32: #{image_deepset_forward.1} parent=11 // pred_fallthru
          _
        // Predicated region
        $region33: #{image_deepset_forward.1} parent=11 // pred_check
          %p312 = pneg %p198
        $region34: #{image_deepset_forward.1} parent=11 // pred_check_branch
          %314 = sbr.rel (%p312) target = $region36
        $region35: #{image_deepset_forward.1} parent=11 // pred_region
          _
        $region36: #{image_deepset_forward.1} parent=11 // pred_fallthru
          _
        // Predicated region
        $region37: #{image_deepset_forward.1} parent=11 // pred_check
          %p315 = pneg %p219
        $region38: #{image_deepset_forward.1} parent=11 // pred_check_branch
          %317 = sbr.rel (%p315) target = $region40
        $region39: #{image_deepset_forward.1} parent=11 // pred_region
          _
        $region40: #{image_deepset_forward.1} parent=11 // pred_fallthru
          _
        // Predicated region
        $region41: #{image_deepset_forward.1} parent=11 // pred_check
          %p318 = pneg %p240
        $region42: #{image_deepset_forward.1} parent=11 // pred_check_branch
          %320 = sbr.rel (%p318) target = $region44
        $region43: #{image_deepset_forward.1} parent=11 // pred_region
          _
        $region44: #{image_deepset_forward.1} parent=11 // pred_fallthru
          _
      $region12: #{image_deepset_forward.1} parent=5 // pred_fallthru
        _
      %p321 = scmp.lt.s32.totalorder %s20, 2
      // Predicated region
      $region45: #{image_deepset_forward.1} parent=5 // pred_check
        %p322 = pneg %p321
      $region46: #{image_deepset_forward.1} parent=5 // pred_check_branch
        %324 = sbr.rel (%p322) target = $region48
      $region47: #{image_deepset_forward.1} parent=5 // pred_region
        // Predicated region
        $region49: #{image_deepset_forward.1} parent=47 // pred_check
          %p325 = pneg %p40
        $region50: #{image_deepset_forward.1} parent=47 // pred_check_branch
          %327 = sbr.rel (%p325) target = $region52
        $region51: #{image_deepset_forward.1} parent=47 // pred_region
          %p328 = scmp.lt.s32.totalorder %s20, 1
          %s329 = scalar_select %p328, %s20, 1
          %s330 = smul.addr %s329, 9
          %s331 = smul.addr %s330, 8
          %s332 = scalar_lea.vmem %s0, %s331
        $region52: #{image_deepset_forward.1} parent=47 // pred_fallthru
          _
        // Predicated region
        $region53: #{image_deepset_forward.1} parent=47 // pred_check
          %p333 = pneg %p66
        $region54: #{image_deepset_forward.1} parent=47 // pred_check_branch
          %335 = sbr.rel (%p333) target = $region56
        $region55: #{image_deepset_forward.1} parent=47 // pred_region
          %p336 = scmp.lt.s32.totalorder %s20, 1
          %s337 = scalar_select %p336, %s20, 1
          %s338 = smul.addr %s337, 2
          %s339 = scalar_lea.vmem %s1, %s338
        $region56: #{image_deepset_forward.1} parent=47 // pred_fallthru
          _
      $region48: #{image_deepset_forward.1} parent=5 // pred_fallthru
        _
      %p340 = scmp.le.s32.totalorder 1, %s20
      %p341 = scmp.lt.s32.totalorder %s20, 3
      %p342 = pnand %p340, %p341
      %p343 = pneg %p342
      // Predicated region
      $region57: #{image_deepset_forward.1} parent=5 // pred_check
        _
      $region58: #{image_deepset_forward.1} parent=5 // pred_check_branch
        %345 = sbr.rel (%p342) target = $region60
      $region59: #{image_deepset_forward.1} parent=5 // pred_region
        %s346 = ssub.s32 %s20, 1
        // Predicated region
        $region61: #{image_deepset_forward.1} parent=59 // pred_check
          %p347 = pneg %p93
        $region62: #{image_deepset_forward.1} parent=59 // pred_check_branch
          %349 = sbr.rel (%p347) target = $region64
        $region63: #{image_deepset_forward.1} parent=59 // pred_region
          %350 = dma.done [#allocation4], 16
        $region64: #{image_deepset_forward.1} parent=59 // pred_fallthru
          _
        // Predicated region
        $region65: #{image_deepset_forward.1} parent=59 // pred_check
          %p351 = pneg %p114
        $region66: #{image_deepset_forward.1} parent=59 // pred_check_branch
          %353 = sbr.rel (%p351) target = $region68
        $region67: #{image_deepset_forward.1} parent=59 // pred_region
          %354 = dma.done [#allocation6], 16
        $region68: #{image_deepset_forward.1} parent=59 // pred_fallthru
          _
        %355 = sfence
        %p356 = scmp.lt.s32.totalorder %s25, 1
        %s357 = scalar_select %p356, %s25, 1
        %s358 = smul.addr %s357, 9
        %s359 = smul.addr %s358, 8
        %s360 = scalar_lea.vmem %s0, %s359
        %p361 = pneg %p46
        %p362 = pneg %p43
        %p363 = scmp.lt.s32.totalorder %s25, 1
        %s364 = scalar_select %p363, %s25, 1
        %s365 = smul.addr %s364, 2
        %s366 = scalar_lea.vmem %s1, %s365
        %p367 = pneg %p72
        %p368 = pneg %p69
        %p369 = pneg %p93
        %p370 = pneg %p90
        %p371 = pneg %p114
        %p372 = pneg %p111
        %p373 = pneg %p135
        %p374 = pneg %p132
        %p375 = pneg %p156
        %p376 = pneg %p153
        %p377 = pneg %p177
        %p378 = pneg %p174
        %p379 = pneg %p198
        %p380 = pneg %p195
        %p381 = pneg %p219
        %p382 = pneg %p216
        %p383 = pneg %p240
        %p384 = pneg %p237
        %p385 = pneg %p266
        %p386 = pneg %p263
        %p387 = scmp.lt.s32.totalorder %s25, 1
        %s388 = scalar_select %p387, %s25, 1
        %s389 = smul.addr %s388, 2
        %s390 = scalar_lea.vmem %s10, %s389
        %p391 = scmp.lt.s32.totalorder %s25, 1
        %s392 = scalar_select %p391, %s25, 1
        %s393 = smul.addr %s392, 9
        %s394 = smul.addr %s393, 8
        %s395 = scalar_lea.vmem %s0, %s394
        %p396 = scmp.lt.s32.totalorder %s25, 1
        %s397 = scalar_select %p396, %s25, 1
        %s398 = smul.addr %s397, 2
        %s399 = scalar_lea.vmem %s1, %s398
        %p400 = scmp.lt.s32.totalorder %s25, 1
        %s401 = scalar_select %p400, %s25, 1
        %s402 = smul.addr %s401, 2
        %s403 = scalar_lea.vmem %s10, %s402
        %v404 = vld [vmem:[%s395] sm:$0xff]
        %s405 = scalar_lea.vmem %s395, 8
        %v406 = vld [vmem:[%s405] sm:$0xff]
        %s407 = scalar_lea.vmem %s395, 16
        %v408 = vld [vmem:[%s407] sm:$0xff]
        %s409 = scalar_lea.vmem %s395, 24
        %v410 = vld [vmem:[%s409] sm:$0xff]
        %s411 = scalar_lea.vmem %s395, 32
        %v412 = vld [vmem:[%s411] sm:$0xff]
        %s413 = scalar_lea.vmem %s395, 40
        %v414 = vld [vmem:[%s413] sm:$0xff]
        %s415 = scalar_lea.vmem %s395, 48
        %v416 = vld [vmem:[%s415] sm:$0xff]
        %s417 = scalar_lea.vmem %s395, 56
        %v418 = vld [vmem:[%s417] sm:$0xff]
        %s419 = scalar_lea.vmem %s395, 64
        %v420 = vld [vmem:[%s419] sm:$0xff]
        %s421 = sld [smem:[#allocation3]]
        %v422 = vstv %s421
        %v423 = vmul.f32 %v404, %v422
        %s424 = sld [smem:[#allocation3 + $0x1]]
        %v425 = vstv %s424
        %v426 = vmul.f32 %v406, %v425
        %v427 = vadd.f32 %v423, %v426
        %s428 = sld [smem:[#allocation3 + $0x2]]
        %v429 = vstv %s428
        %v430 = vmul.f32 %v408, %v429
        %v431 = vadd.f32 %v427, %v430
        %s432 = sld [smem:[#allocation3 + $0x3]]
        %v433 = vstv %s432
        %v434 = vmul.f32 %v410, %v433
        %v435 = vadd.f32 %v431, %v434
        %s436 = sld [smem:[#allocation3 + $0x4]]
        %v437 = vstv %s436
        %v438 = vmul.f32 %v412, %v437
        %v439 = vadd.f32 %v435, %v438
        %s440 = sld [smem:[#allocation3 + $0x5]]
        %v441 = vstv %s440
        %v442 = vmul.f32 %v414, %v441
        %v443 = vadd.f32 %v439, %v442
        %s444 = sld [smem:[#allocation3 + $0x6]]
        %v445 = vstv %s444
        %v446 = vmul.f32 %v416, %v445
        %v447 = vadd.f32 %v443, %v446
        %s448 = sld [smem:[#allocation3 + $0x7]]
        %v449 = vstv %s448
        %v450 = vmul.f32 %v418, %v449
        %v451 = vadd.f32 %v447, %v450
        %s452 = sld [smem:[#allocation3 + $0x8]]
        %v453 = vstv %s452
        %v454 = vmul.f32 %v420, %v453
        %v455 = vadd.f32 %v451, %v454
        %s456 = sld [smem:[#allocation5]]
        %v457 = vstv %s456
        %v458 = vadd.f32 %v455, %v457
        %v459 = vtanh.pop %v458
        %s460 = sld [smem:[#allocation3 + $0x9]]
        %v461 = vstv %s460
        %v462 = vmul.f32 %v404, %v461
        %s463 = sld [smem:[#allocation3 + $0xa]]
        %v464 = vstv %s463
        %v465 = vmul.f32 %v406, %v464
        %v466 = vadd.f32 %v462, %v465
        %s467 = sld [smem:[#allocation3 + $0xb]]
        %v468 = vstv %s467
        %v469 = vmul.f32 %v408, %v468
        %v470 = vadd.f32 %v466, %v469
        %s471 = sld [smem:[#allocation3 + $0xc]]
        %v472 = vstv %s471
        %v473 = vmul.f32 %v410, %v472
        %v474 = vadd.f32 %v470, %v473
        %s475 = sld [smem:[#allocation3 + $0xd]]
        %v476 = vstv %s475
        %v477 = vmul.f32 %v412, %v476
        %v478 = vadd.f32 %v474, %v477
        %s479 = sld [smem:[#allocation3 + $0xe]]
        %v480 = vstv %s479
        %v481 = vmul.f32 %v414, %v480
        %v482 = vadd.f32 %v478, %v481
        %s483 = sld [smem:[#allocation3 + $0xf]]
        %v484 = vstv %s483
        %v485 = vmul.f32 %v416, %v484
        %v486 = vadd.f32 %v482, %v485
        %s487 = sld [smem:[#allocation3 + $0x10]]
        %v488 = vstv %s487
        %v489 = vmul.f32 %v418, %v488
        %v490 = vadd.f32 %v486, %v489
        %s491 = sld [smem:[#allocation3 + $0x11]]
        %v492 = vstv %s491
        %v493 = vmul.f32 %v420, %v492
        %v494 = vadd.f32 %v490, %v493
        %s495 = sld [smem:[#allocation5 + $0x1]]
        %v496 = vstv %s495
        %v497 = vadd.f32 %v494, %v496
        %v498 = vtanh.pop %v497
        %s499 = sld [smem:[#allocation3 + $0x12]]
        %v500 = vstv %s499
        %v501 = vmul.f32 %v404, %v500
        %s502 = sld [smem:[#allocation3 + $0x13]]
        %v503 = vstv %s502
        %v504 = vmul.f32 %v406, %v503
        %v505 = vadd.f32 %v501, %v504
        %s506 = sld [smem:[#allocation3 + $0x14]]
        %v507 = vstv %s506
        %v508 = vmul.f32 %v408, %v507
        %v509 = vadd.f32 %v505, %v508
        %s510 = sld [smem:[#allocation3 + $0x15]]
        %v511 = vstv %s510
        %v512 = vmul.f32 %v410, %v511
        %v513 = vadd.f32 %v509, %v512
        %s514 = sld [smem:[#allocation3 + $0x16]]
        %v515 = vstv %s514
        %v516 = vmul.f32 %v412, %v515
        %v517 = vadd.f32 %v513, %v516
        %s518 = sld [smem:[#allocation3 + $0x17]]
        %v519 = vstv %s518
        %v520 = vmul.f32 %v414, %v519
        %v521 = vadd.f32 %v517, %v520
        %s522 = sld [smem:[#allocation3 + $0x18]]
        %v523 = vstv %s522
        %v524 = vmul.f32 %v416, %v523
        %v525 = vadd.f32 %v521, %v524
        %s526 = sld [smem:[#allocation3 + $0x19]]
        %v527 = vstv %s526
        %v528 = vmul.f32 %v418, %v527
        %v529 = vadd.f32 %v525, %v528
        %s530 = sld [smem:[#allocation3 + $0x1a]]
        %v531 = vstv %s530
        %v532 = vmul.f32 %v420, %v531
        %v533 = vadd.f32 %v529, %v532
        %s534 = sld [smem:[#allocation5 + $0x2]]
        %v535 = vstv %s534
        %v536 = vadd.f32 %v533, %v535
        %v537 = vtanh.pop %v536
        %539 = vrot.lane.b32.xlu0 %v498, 64
        %v540 = vpop.permute.xlu0 %539
        %vm542 = vcmask 523264
        %v543 = vsel %vm542, %v459, %v540
        %v544 = vld [vmem:[%s4] sm:$0xff]
        %v545 = vld [vmem:[%s4 + $0x8] sm:$0xff]
        %v546 = vld [vmem:[%s4 + $0x10] sm:$0xff]
        %v547 = vld [vmem:[%s4 + $0x18] sm:$0xff]
        %v548 = vld [vmem:[%s4 + $0x20] sm:$0xff]
        %v549 = vld [vmem:[%s4 + $0x28] sm:$0xff]
        %v550 = vld [vmem:[%s4 + $0x30] sm:$0xff]
        %v551 = vld [vmem:[%s4 + $0x38] sm:$0xff]
        %v552 = vld [vmem:[%s4 + $0x40] sm:$0xff]
        %v553 = vld [vmem:[%s4 + $0x48] sm:$0xff]
        %v554 = vld [vmem:[%s4 + $0x50] sm:$0xff]
        %v555 = vld [vmem:[%s4 + $0x58] sm:$0xff]
        %v556 = vld [vmem:[%s4 + $0x60] sm:$0xff]
        %v557 = vld [vmem:[%s4 + $0x68] sm:$0xff]
        %v558 = vld [vmem:[%s4 + $0x70] sm:$0xff]
        %v559 = vld [vmem:[%s4 + $0x78] sm:$0xff]
        %v560 = vld [vmem:[%s4 + $0x80] sm:$0xff]
        %v561 = vld [vmem:[%s4 + $0x88] sm:$0xff]
        %v562 = vld [vmem:[%s4 + $0x90] sm:$0xff]
        %v563 = vld [vmem:[%s4 + $0x98] sm:$0xff]
        %v564 = vld [vmem:[%s4 + $0xa0] sm:$0xff]
        %v565 = vld [vmem:[%s4 + $0xa8] sm:$0xff]
        %v566 = vld [vmem:[%s4 + $0xb0] sm:$0xff]
        %v567 = vld [vmem:[%s4 + $0xb8] sm:$0xff]
        %v568 = vld [vmem:[%s5] sm:$0x1]
        %v570 = vlaneseq
        %v571 = vshrl.u32 %v570, 7
        %v572 = vsub.s32 0, %v571
        %v573 = vrot.slane %v568, %v572
        %v576 = vsel %vm542, %v537, 0
        %578 = vmatprep.subr.mxu0 0.0
        %579 = vmatpush1.msra.mxu0 %v559
        %580 = vmatprep.subr.mxu0 0.0
        %581 = vmatpush1.msra.mxu0 %v558
        %582 = vmatprep.subr.mxu0 0.0
        %583 = vmatpush1.msra.mxu0 %v557
        %584 = vmatprep.subr.mxu0 0.0
        %585 = vmatpush1.msra.mxu0 %v556
        %586 = vmatprep.subr.mxu0 0.0
        %587 = vmatpush1.msra.mxu0 %v555
        %588 = vmatprep.subr.mxu0 0.0
        %589 = vmatpush1.msra.mxu0 %v554
        %590 = vmatprep.subr.mxu0 0.0
        %591 = vmatpush1.msra.mxu0 %v553
        %592 = vmatprep.subr.mxu0 0.0
        %593 = vmatpush1.msra.mxu0 %v552
        %594 = vmatprep.subr.mxu0 0.0
        %595 = vmatpush1.msra.mxu0 %v551
        %596 = vmatprep.subr.mxu0 0.0
        %597 = vmatpush1.msra.mxu0 %v550
        %598 = vmatprep.subr.mxu0 0.0
        %599 = vmatpush1.msra.mxu0 %v549
        %600 = vmatprep.subr.mxu0 0.0
        %601 = vmatpush1.msra.mxu0 %v548
        %602 = vmatprep.subr.mxu0 0.0
        %603 = vmatpush1.msra.mxu0 %v547
        %604 = vmatprep.subr.mxu0 0.0
        %605 = vmatpush1.msra.mxu0 %v546
        %606 = vmatprep.subr.mxu0 0.0
        %607 = vmatpush1.msra.mxu0 %v545
        %608 = vmatprep.subr.mxu0 0.0
        %609 = vmatpush1.msra.mxu0 %v544
        %610 = vmatprep.subr.mxu0 0.0
        %611 = vmatpush2.msra.mxu0 0.0
        %612 = vmatprep.subr.mxu0 0.0
        %613 = vmatpush2.msra.mxu0 0.0
        %614 = vmatprep.subr.mxu0 0.0
        %615 = vmatpush2.msra.mxu0 0.0
        %616 = vmatprep.subr.mxu0 0.0
        %617 = vmatpush2.msra.mxu0 0.0
        %618 = vmatprep.subr.mxu0 0.0
        %619 = vmatpush2.msra.mxu0 0.0
        %620 = vmatprep.subr.mxu0 0.0
        %621 = vmatpush2.msra.mxu0 0.0
        %622 = vmatprep.subr.mxu0 0.0
        %623 = vmatpush2.msra.mxu0 0.0
        %624 = vmatprep.subr.mxu0 0.0
        %625 = vmatpush2.msra.mxu0 0.0
        %626 = vmatprep.subr.mxu0 0.0
        %627 = vmatpush2.msra.mxu0 %v567
        %628 = vmatprep.subr.mxu0 0.0
        %629 = vmatpush2.msra.mxu0 %v566
        %630 = vmatprep.subr.mxu0 0.0
        %631 = vmatpush2.msra.mxu0 %v565
        %632 = vmatprep.subr.mxu0 0.0
        %633 = vmatpush2.msra.mxu0 %v564
        %634 = vmatprep.subr.mxu0 0.0
        %635 = vmatpush2.msra.mxu0 %v563
        %636 = vmatprep.subr.mxu0 0.0
        %637 = vmatpush2.msra.mxu0 %v562
        %638 = vmatprep.subr.mxu0 0.0
        %639 = vmatpush2.msra.mxu0 %v561
        %640 = vmatprep.subr.mxu0 0.0
        %641 = vmatpush2.msra.mxu0 %v560
        %642 = vmatprep.mubr.f32.mxu0 %v576
        %643 = vmatmul.mubr.f32.gmra.mxu0 %v543
        %v644 = vpop.f32.mrf.mxu0
        %v645 = vadd.f32 %v573, %v644
        %v646 = vpop.f32.mrf.mxu0
        %647 = vdwg.mxu0
        %v648 = vld [vmem:[%s399] sm:$0x3]
        %v649 = vlaneseq
        %v650 = vshrl.u32 %v649, 7
        %v651 = vsub.s32 0, %v650
        %v652 = vrot.slane %v648, %v651
        %654 = vbcast.lane.b32.xlu0 %v652, 256
        %v655 = vpop.permute.xlu0 %654
        %v656 = vlaneseq
        %v657 = vshrl.u32 %v656, 7
        %v658 = vsub.s32 1, %v657
        %v659 = vrot.slane %v648, %v658
        %661 = vbcast.lane.b32.xlu0 %v659, 256
        %v662 = vpop.permute.xlu0 %661
        %v663 = vadd.f32 %v645, %v655
        %v664 = vadd.f32 %v645, %v662
        %vm665 = vcmask 162816
        %v666 = vsel %vm665, %v663, -inf
        %v667 = vrot.slane %v666, 4
        %v668 = vmax.f32 %v666, %v667
        %v669 = vrot.slane %v668, 2
        %v670 = vmax.f32 %v668, %v669
        %v671 = vrot.slane %v670, 1
        %v672 = vmax.f32 %v670, %v671
        %v673 = vsel %vm665, %v664, -inf
        %v674 = vrot.slane %v673, 4
        %v675 = vmax.f32 %v673, %v674
        %v676 = vrot.slane %v675, 2
        %v677 = vmax.f32 %v675, %v676
        %v678 = vrot.slane %v677, 1
        %v679 = vmax.f32 %v677, %v678
        %v680 = vld [vmem:[%s6] sm:$0xff]
        %v681 = vld [vmem:[%s6 + $0x8] sm:$0xff]
        %v682 = vld [vmem:[%s6 + $0x10] sm:$0xf]
        %v683 = vld [vmem:[%s7] sm:$0x1]
        %v685 = vlaneseq
        %v686 = vshrl.u32 %v685, 7
        %v687 = vsub.s32 0, %v686
        %v688 = vrot.slane %v683, %v687
        %vm692 = vcmask 1041409
        %v693 = vsel %vm692, %v679, %v672
        %v694 = vsel %vm665, %v693, 0
        %vm696 = vcmask 1043456
        %v698 = vsel %vm696, %v682, 0
        %700 = vmatprep.subr.mxu0 0.0
        %701 = vmatpush1.msra.mxu0 0.0
        %702 = vmatprep.subr.mxu0 0.0
        %703 = vmatpush1.msra.mxu0 0.0
        %704 = vmatprep.subr.mxu0 0.0
        %705 = vmatpush1.msra.mxu0 0.0
        %706 = vmatprep.subr.mxu0 0.0
        %707 = vmatpush1.msra.mxu0 0.0
        %708 = vmatprep.subr.mxu0 0.0
        %709 = vmatpush1.msra.mxu0 0.0
        %710 = vmatprep.subr.mxu0 0.0
        %711 = vmatpush1.msra.mxu0 0.0
        %712 = vmatprep.subr.mxu0 0.0
        %713 = vmatpush1.msra.mxu0 0.0
        %714 = vmatprep.subr.mxu0 0.0
        %715 = vmatpush1.msra.mxu0 0.0
        %716 = vmatprep.subr.mxu0 0.0
        %717 = vmatpush1.msra.mxu0 0.0
        %718 = vmatprep.subr.mxu0 0.0
        %719 = vmatpush1.msra.mxu0 0.0
        %720 = vmatprep.subr.mxu0 0.0
        %721 = vmatpush1.msra.mxu0 0.0
        %722 = vmatprep.subr.mxu0 0.0
        %723 = vmatpush1.msra.mxu0 0.0
        %724 = vmatprep.subr.mxu0 0.0
        %725 = vmatpush1.msra.mxu0 0.0
        %726 = vmatprep.subr.mxu0 0.0
        %727 = vmatpush1.msra.mxu0 %v698
        %728 = vmatprep.subr.mxu0 0.0
        %729 = vmatpush1.msra.mxu0 %v681
        %730 = vmatprep.subr.mxu0 0.0
        %731 = vmatpush1.msra.mxu0 %v680
        %732 = vmatprep.subr.mxu0 0.0
        %733 = vmatpush2.msra.mxu0 0.0
        %734 = vmatprep.subr.mxu0 0.0
        %735 = vmatpush2.msra.mxu0 0.0
        %736 = vmatprep.subr.mxu0 0.0
        %737 = vmatpush2.msra.mxu0 0.0
        %738 = vmatprep.subr.mxu0 0.0
        %739 = vmatpush2.msra.mxu0 0.0
        %740 = vmatprep.subr.mxu0 0.0
        %741 = vmatpush2.msra.mxu0 0.0
        %742 = vmatprep.subr.mxu0 0.0
        %743 = vmatpush2.msra.mxu0 0.0
        %744 = vmatprep.subr.mxu0 0.0
        %745 = vmatpush2.msra.mxu0 0.0
        %746 = vmatprep.subr.mxu0 0.0
        %747 = vmatpush2.msra.mxu0 0.0
        %748 = vmatprep.subr.mxu0 0.0
        %749 = vmatpush2.msra.mxu0 0.0
        %750 = vmatprep.subr.mxu0 0.0
        %751 = vmatpush2.msra.mxu0 0.0
        %752 = vmatprep.subr.mxu0 0.0
        %753 = vmatpush2.msra.mxu0 0.0
        %754 = vmatprep.subr.mxu0 0.0
        %755 = vmatpush2.msra.mxu0 0.0
        %756 = vmatprep.subr.mxu0 0.0
        %757 = vmatpush2.msra.mxu0 0.0
        %758 = vmatprep.subr.mxu0 0.0
        %759 = vmatpush2.msra.mxu0 0.0
        %760 = vmatprep.subr.mxu0 0.0
        %761 = vmatpush2.msra.mxu0 0.0
        %762 = vmatprep.subr.mxu0 0.0
        %763 = vmatpush2.msra.mxu0 0.0
        %764 = vmatprep.mubr.f32.mxu0 0.0
        %765 = vmatmul.mubr.f32.gmra.mxu0 %v694
        %v766 = vpop.f32.mrf.mxu0
        %v767 = vadd.f32 %v688, %v766
        %v768 = vpop.f32.mrf.mxu0
        %769 = vdwg.mxu0
        %v770 = vtanh.pop %v767
        %v771 = vld [vmem:[%s8] sm:$0xff]
        %v772 = vld [vmem:[%s8 + $0x8] sm:$0xff]
        %v773 = vld [vmem:[%s8 + $0x10] sm:$0xff]
        %v774 = vld [vmem:[%s8 + $0x18] sm:$0xff]
        %v775 = vld [vmem:[%s8 + $0x20] sm:$0xff]
        %v776 = vld [vmem:[#allocation2] sm:$0x1]
        %v778 = vlaneseq
        %v779 = vshrl.u32 %v778, 7
        %v780 = vsub.s32 0, %v779
        %v781 = vrot.slane %v776, %v780
        %vm783 = vcmask 326656
        %v785 = vsel %vm783, %v770, 0
        %787 = vmatprep.subr.mxu0 0.0
        %788 = vmatpush1.msra.mxu0 0.0
        %789 = vmatprep.subr.mxu0 0.0
        %790 = vmatpush1.msra.mxu0 0.0
        %791 = vmatprep.subr.mxu0 0.0
        %792 = vmatpush1.msra.mxu0 0.0
        %793 = vmatprep.subr.mxu0 0.0
        %794 = vmatpush1.msra.mxu0 0.0
        %795 = vmatprep.subr.mxu0 0.0
        %796 = vmatpush1.msra.mxu0 0.0
        %797 = vmatprep.subr.mxu0 0.0
        %798 = vmatpush1.msra.mxu0 0.0
        %799 = vmatprep.subr.mxu0 0.0
        %800 = vmatpush1.msra.mxu0 0.0
        %801 = vmatprep.subr.mxu0 0.0
        %802 = vmatpush1.msra.mxu0 0.0
        %803 = vmatprep.subr.mxu0 0.0
        %804 = vmatpush1.msra.mxu0 0.0
        %805 = vmatprep.subr.mxu0 0.0
        %806 = vmatpush1.msra.mxu0 0.0
        %807 = vmatprep.subr.mxu0 0.0
        %808 = vmatpush1.msra.mxu0 0.0
        %809 = vmatprep.subr.mxu0 0.0
        %810 = vmatpush1.msra.mxu0 %v775
        %811 = vmatprep.subr.mxu0 0.0
        %812 = vmatpush1.msra.mxu0 %v774
        %813 = vmatprep.subr.mxu0 0.0
        %814 = vmatpush1.msra.mxu0 %v773
        %815 = vmatprep.subr.mxu0 0.0
        %816 = vmatpush1.msra.mxu0 %v772
        %817 = vmatprep.subr.mxu0 0.0
        %818 = vmatpush1.msra.mxu0 %v771
        %819 = vmatprep.subr.mxu0 0.0
        %820 = vmatpush2.msra.mxu0 0.0
        %821 = vmatprep.subr.mxu0 0.0
        %822 = vmatpush2.msra.mxu0 0.0
        %823 = vmatprep.subr.mxu0 0.0
        %824 = vmatpush2.msra.mxu0 0.0
        %825 = vmatprep.subr.mxu0 0.0
        %826 = vmatpush2.msra.mxu0 0.0
        %827 = vmatprep.subr.mxu0 0.0
        %828 = vmatpush2.msra.mxu0 0.0
        %829 = vmatprep.subr.mxu0 0.0
        %830 = vmatpush2.msra.mxu0 0.0
        %831 = vmatprep.subr.mxu0 0.0
        %832 = vmatpush2.msra.mxu0 0.0
        %833 = vmatprep.subr.mxu0 0.0
        %834 = vmatpush2.msra.mxu0 0.0
        %835 = vmatprep.subr.mxu0 0.0
        %836 = vmatpush2.msra.mxu0 0.0
        %837 = vmatprep.subr.mxu0 0.0
        %838 = vmatpush2.msra.mxu0 0.0
        %839 = vmatprep.subr.mxu0 0.0
        %840 = vmatpush2.msra.mxu0 0.0
        %841 = vmatprep.subr.mxu0 0.0
        %842 = vmatpush2.msra.mxu0 0.0
        %843 = vmatprep.subr.mxu0 0.0
        %844 = vmatpush2.msra.mxu0 0.0
        %845 = vmatprep.subr.mxu0 0.0
        %846 = vmatpush2.msra.mxu0 0.0
        %847 = vmatprep.subr.mxu0 0.0
        %848 = vmatpush2.msra.mxu0 0.0
        %849 = vmatprep.subr.mxu0 0.0
        %850 = vmatpush2.msra.mxu0 0.0
        %851 = vmatprep.mubr.f32.mxu0 0.0
        %852 = vmatmul.mubr.f32.gmra.mxu0 %v785
        %v853 = vpop.f32.mrf.mxu0
        %v854 = vadd.f32 %v781, %v853
        %v855 = vpop.f32.mrf.mxu0
        %856 = vdwg.mxu0
        %vm857 = vcmask 1024
        %858 = vst.msk [vmem:[%s403] sm:$0x3] %vm857, %v854
        %p859 = scmp.lt.s32.totalorder %s25, 1
        %s860 = scalar_select %p859, %s25, 1
        %s861 = smul.addr %s860, 2
        %s862 = scalar_lea.vmem %s10, %s861
        // Predicated region
        $region69: #{image_deepset_forward.1} parent=59 // pred_check
          %p863 = pneg %p263
        $region70: #{image_deepset_forward.1} parent=59 // pred_check_branch
          %865 = sbr.rel (%p863) target = $region72
        $region71: #{image_deepset_forward.1} parent=59 // pred_region
          _
        $region72: #{image_deepset_forward.1} parent=59 // pred_fallthru
          _
      $region60: #{image_deepset_forward.1} parent=5 // pred_fallthru
        _
      %p866 = scmp.le.s32.totalorder 2, %s20
      // Predicated region
      $region73: #{image_deepset_forward.1} parent=5 // pred_check
        %p867 = pneg %p866
      $region74: #{image_deepset_forward.1} parent=5 // pred_check_branch
        %869 = sbr.rel (%p867) target = $region76
      $region75: #{image_deepset_forward.1} parent=5 // pred_region
        %s870 = ssub.s32 %s20, 2
        // Predicated region
        $region77: #{image_deepset_forward.1} parent=75 // pred_check
          %p871 = pneg %p269
        $region78: #{image_deepset_forward.1} parent=75 // pred_check_branch
          %873 = sbr.rel (%p871) target = $region80
        $region79: #{image_deepset_forward.1} parent=75 // pred_region
          %p874 = scmp.lt.s32.totalorder %s26, 1
          %s875 = scalar_select %p874, %s26, 1
          %s876 = smul.addr %s875, 2
          %s877 = scalar_lea.vmem %s10, %s876
        $region80: #{image_deepset_forward.1} parent=75 // pred_fallthru
          _
      $region76: #{image_deepset_forward.1} parent=5 // pred_fallthru
        _
    $region6: #{image_deepset_forward.1} parent=1 // loop_footer
      %s24 = sadd.s32 1, %s20
    $region7: #{image_deepset_forward.1} parent=1 // loop_footer_branch
      %19 = sbr.rel target = $region3
    $region8: #{image_deepset_forward.1} parent=1 // loop_exit
      _
    %878 = vsyncpa [#allocation4], 1
    %s879 = scalar_lea.sflag [#allocation4], 1
    %880 = vsyncpa %s879, 1
    %881 = vsyncpa [#allocation6], 1

</llo_original>
